<compile_context>
chip_gen: v7x
topology: tpu7x:2x2x1
jax: 0.10.0
libtpu: 0.0.40
codegen_flags: <defaults>
</compile_context>

<pallas_src>
import functools

import jax
import jax.numpy as jnp
from jax import lax
from jax.experimental import pallas as pl
from jax.experimental.pallas import tpu as pltpu


def _gat_batch_kernel(x_ref, xt_ref, adjt_ref, wcat_ref, wa1_ref, o_ref, *,
                      n_head, n_type, d, negative_slope):
    """One batch element: all heads / edge types of the GAT attention layer."""
    x = x_ref[0]                                  # (E, in_dim)   f32
    x_t = xt_ref[0]                               # (in_dim, E)   f32
    adj_t = adjt_ref[0].astype(jnp.int32)         # (E, E)  adj_t[k, j] = adj[j, k]
    w_cat = wcat_ref[...]                         # (in_dim, n_head*n_type*(d+1))
    wa1 = wa1_ref[...]                            # (n_head*n_type, in_dim)

    e = x.shape[0]

    # One wide MXU matmul: every per-(head,type) projection H plus every a2
    # dot-product (as trailing columns).
    proj = jnp.dot(x, w_cat, preferred_element_type=jnp.float32)
    # One MXU matmul for all a1 dot-products, already in row (lane) form.
    u_all = jnp.dot(wa1, x_t, preferred_element_type=jnp.float32)   # (nh*nt, E)

    hv_cols = n_head * n_type * d
    neg = jnp.float32(negative_slope)

    # Edge masks are identical for every head: compute them once per step.
    type_masks = [adj_t == (i + 1) for i in range(n_type)]
    no_edge = adj_t <= 0

    head_outs = []
    for h in range(n_head):                       # static -> unrolled
        scores_t = jnp.zeros((e, e), jnp.float32)
        h_last = None
        for i in range(n_type):                   # static -> unrolled
            idx = h * n_type + i
            h_i = proj[:, idx * d:(idx + 1) * d]                      # (E, d)
            v_col = proj[:, hv_cols + idx:hv_cols + idx + 1]          # (E, 1)
            u_row = u_all[idx:idx + 1, :]                             # (1, E)
            pre_t = v_col + u_row                                     # (E, E)
            leaky = jnp.maximum(pre_t, neg * pre_t)                   # LeakyReLU(0.2)
            scores_t = scores_t + jnp.where(type_masks[i], leaky, 0.0)
            h_last = h_i                          # aggregation uses last-type h
        scores_t = jnp.where(no_edge, jnp.float32(-1e30), scores_t)
        # softmax over k (axis 0 in the transposed layout)
        m = jnp.max(scores_t, axis=0, keepdims=True)                  # (1, E)
        p = jnp.exp(scores_t - m)
        denom = jnp.sum(p, axis=0, keepdims=True)                     # (1, E)
        coefs_t = p * pl.reciprocal(denom, approx=False)
        # out[k, :] = sum_j coefs[j, k] * h_last[j, :]  ==  coefs_t @ h_last
        head_outs.append(jnp.dot(coefs_t, h_last,
                                 preferred_element_type=jnp.float32))  # (E, d)

    out = jnp.concatenate(head_outs, axis=-1)     # (E, n_head*d) lane-dense slab
    out = jnp.maximum(out, 0.0)                   # eval-mode dropout + ReLU
    o_ref[0] = out.astype(o_ref.dtype)


def _vmem_limit_bytes():
    """Explicit scoped-VMEM limit: ~3/4 of chip capacity, capped at 100 MiB."""
    try:
        cap = pltpu.get_tpu_info().vmem_capacity_bytes
        return int(min(cap * 3 // 4, 100 * 1024 * 1024))
    except Exception:
        return None   # fall back to the compiler default


def attention_layer_forward(x, adj, w_all, a1_all, a2_all, *, negative_slope=0.2):
    """Pallas forward for AttentionLayer (multi-head GATSelfAttention).

    x      : (N, E, in_dim)               node features
    adj    : (N, E, E)                    edge types (0 = no edge, 1..n_type)
    w_all  : (n_head, n_type, in_dim, d)  per-head/type W_type
    a1_all : (n_head, n_type, d)          first  half of per-head/type a_type
    a2_all : (n_head, n_type, d)          second half of per-head/type a_type
    returns (N, E, n_head * d)
    """
    # TODO(synk): q_attn=True query gating, node_mask and training-mode dropout
    # are not implemented (module defaults / eval-mode semantics are used); the
    # unused self.align_dim Linear is never called in the reference forward.
    n, e, in_dim = x.shape
    n_head, n_type, _, d = w_all.shape
    out_dtype = x.dtype
    hp = lax.Precision.HIGHEST

    # ---- host-side parameter folding (tiny, parameter-only, full precision) --
    # W_cat = [ all W[h,i] stacked on the lane axis | all W[h,i] @ a2[h,i] ]
    w_full = jnp.transpose(w_all, (2, 0, 1, 3)).reshape(in_dim, n_head * n_type * d)
    wa2 = jnp.einsum('htid,htd->hti', w_all, a2_all, precision=hp)
    wa2_cols = wa2.reshape(n_head * n_type, in_dim).T              # (in_dim, nh*nt)
    w_cat = jnp.concatenate([w_full, wa2_cols], axis=1).astype(jnp.float32)
    # Rows for the u matmul: u_{h,i}[j] = x[j] . (W[h,i] @ a1[h,i])
    wa1 = jnp.einsum('htid,htd->hti', w_all, a1_all, precision=hp)
    wa1_rows = wa1.reshape(n_head * n_type, in_dim).astype(jnp.float32)

    # ---- host-side activation prep ----
    x32 = x.astype(jnp.float32)
    x_t = jnp.swapaxes(x32, 1, 2)                                   # (N, in_dim, E)
    adj_int = jnp.int8 if n_type < 127 else jnp.int32
    adj_t = jnp.swapaxes(adj, 1, 2).astype(adj_int)                 # narrow int stream

    n_cols = n_head * n_type * (d + 1)
    kernel = functools.partial(_gat_batch_kernel, n_head=n_head, n_type=n_type,
                               d=d, negative_slope=negative_slope)

    # TODO(synk): for very large graphs (E >~ 1.5-2K on v7x's 64 MiB VMEM) the
    # whole ExE working set no longer fits one step; a k-tiled two-pass softmax
    # path would be needed there.
    out = pl.pallas_call(
        kernel,
        out_shape=jax.ShapeDtypeStruct((n, e, n_head * d), out_dtype),
        grid_spec=pltpu.PrefetchScalarGridSpec(
            num_scalar_prefetch=0,
            grid=(n,),                              # batch axis only; heads in-kernel
            in_specs=[
                pl.BlockSpec((1, e, in_dim), lambda b: (b, 0, 0)),
                pl.BlockSpec((1, in_dim, e), lambda b: (b, 0, 0)),
                pl.BlockSpec((1, e, e), lambda b: (b, 0, 0)),
                pl.BlockSpec((in_dim, n_cols), lambda b: (0, 0)),
                pl.BlockSpec((n_head * n_type, in_dim), lambda b: (0, 0)),
            ],
            out_specs=pl.BlockSpec((1, e, n_head * d), lambda b: (b, 0, 0)),
        ),
        compiler_params=pltpu.CompilerParams(
            dimension_semantics=("parallel",),
            vmem_limit_bytes=_vmem_limit_bytes(),
        ),
    )(x32, x_t, adj_t, w_cat, wa1_rows)
    return out


def _reference(x, adj, w_all, a1_all, a2_all, negative_slope=0.2):
    """Plain-JAX replica of the PyTorch forward (eval mode, q_attn=False)."""
    n_head, n_type = w_all.shape[0], w_all.shape[1]
    hp = jax.lax.Precision.HIGHEST
    heads = []
    for hh in range(n_head):
        scores = jnp.zeros(adj.shape, jnp.float32)
        h_mat = None
        for i in range(n_type):
            h_mat = jnp.einsum('nei,id->ned', x, w_all[hh, i], precision=hp)
            f = jnp.einsum('ned,d->ne', h_mat, a1_all[hh, i], precision=hp)
            g = jnp.einsum('ned,d->ne', h_mat, a2_all[hh, i], precision=hp)
            pre = f[:, :, None] + g[:, None, :]
            sc = jnp.where(pre > 0, pre, negative_slope * pre)
            scores = scores + jnp.where(adj == (i + 1), sc, 0.0)
        scores = jnp.where(adj > 0, scores, -1e30)
        coefs = jax.nn.softmax(scores, axis=2)
        heads.append(jnp.einsum('njk,njd->nkd', coefs, h_mat, precision=hp))
    return jnp.maximum(jnp.concatenate(heads, axis=-1), 0.0)


if __name__ == "__main__":
    key = jax.random.PRNGKey(0)
    batch, n_nodes, in_dim, hid_dim, n_head, n_type = 2, 8, 32, 32, 2, 3
    d = hid_dim // n_head

    k1, k2, k3, k4, k5 = jax.random.split(key, 5)
    x = jax.random.normal(k1, (batch, n_nodes, in_dim), dtype=jnp.float32)
    adj = jax.random.randint(k2, (batch, n_nodes, n_nodes), 0, n_type + 1,
                             dtype=jnp.int32)
    # Deterministic xavier-like init for W_type / a_type (split into halves).
    w_all = 0.25 * jax.random.normal(k3, (n_head, n_type, in_dim, d),
                                     dtype=jnp.float32)
    a1_all = 0.25 * jax.random.normal(k4, (n_head, n_type, d), dtype=jnp.float32)
    a2_all = 0.25 * jax.random.normal(k5, (n_head, n_type, d), dtype=jnp.float32)

    y = attention_layer_forward(x, adj, w_all, a1_all, a2_all)
    y = jax.block_until_ready(y)

    ref = _reference(x, adj, w_all, a1_all, a2_all)
    assert y.shape == (batch, n_nodes, hid_dim), y.shape
    # Tolerance reflects default (non-HIGHEST) MXU precision inside the kernel.
    assert jnp.allclose(y, ref, atol=2e-3, rtol=2e-3), \
        float(jnp.max(jnp.abs(y - ref)))
    print("KERNEL_OK")
</pallas_src>

<mosaic_0001>
module attributes {stable_mosaic.version = 11 : i64} {
  func.func @_gat_batch_kernel(%arg0: i32, %arg1: memref<1x8x32xf32, #tpu.memory_space<vmem>>, %arg2: memref<1x32x8xf32, #tpu.memory_space<vmem>>, %arg3: memref<1x8x8xi8, #tpu.memory_space<vmem>>, %arg4: memref<32x102xf32, #tpu.memory_space<vmem>>, %arg5: memref<6x32xf32, #tpu.memory_space<vmem>>, %arg6: memref<1x8x32xf32, #tpu.memory_space<vmem>>) attributes {dimension_semantics = [#tpu.dimension_semantics<parallel>], iteration_bounds = array<i64: 2>, scalar_prefetch = 0 : i64, scratch_operands = 0 : i64, tpu.core_type = #tpu.core_type<tc>, window_params = [{transform_indices = @transform_0, window_bounds = array<i64: 1, 8, 32>}, {transform_indices = @transform_1, window_bounds = array<i64: 1, 32, 8>}, {transform_indices = @transform_2, window_bounds = array<i64: 1, 8, 8>}, {pipeline_mode = #tpu.pipeline_mode<synchronous>, transform_indices = @transform_3, window_bounds = array<i64: 32, 102>}, {pipeline_mode = #tpu.pipeline_mode<synchronous>, transform_indices = @transform_4, window_bounds = array<i64: 6, 32>}, {transform_indices = @transform_5, window_bounds = array<i64: 1, 8, 32>}]} {
    %c0 = arith.constant 0 : index
    %c0_0 = arith.constant 0 : index
    %c0_1 = arith.constant 0 : index
    %0 = vector.load %arg1[%c0, %c0_0, %c0_1] : memref<1x8x32xf32, #tpu.memory_space<vmem>>, vector<1x8x32xf32>
    %1 = vector.shape_cast %0 : vector<1x8x32xf32> to vector<8x32xf32>
    %c0_2 = arith.constant 0 : index
    %c0_3 = arith.constant 0 : index
    %c0_4 = arith.constant 0 : index
    %2 = vector.load %arg2[%c0_2, %c0_3, %c0_4] : memref<1x32x8xf32, #tpu.memory_space<vmem>>, vector<1x32x8xf32>
    %3 = vector.shape_cast %2 : vector<1x32x8xf32> to vector<32x8xf32>
    %c0_5 = arith.constant 0 : index
    %c0_6 = arith.constant 0 : index
    %c0_7 = arith.constant 0 : index
    %4 = vector.load %arg3[%c0_5, %c0_6, %c0_7] : memref<1x8x8xi8, #tpu.memory_space<vmem>>, vector<1x8x8xi8>
    %5 = vector.shape_cast %4 : vector<1x8x8xi8> to vector<8x8xi8>
    %6 = arith.extsi %5 : vector<8x8xi8> to vector<8x8xi32>
    %c0_8 = arith.constant 0 : index
    %c0_9 = arith.constant 0 : index
    %7 = vector.load %arg4[%c0_8, %c0_9] : memref<32x102xf32, #tpu.memory_space<vmem>>, vector<32x102xf32>
    %c0_10 = arith.constant 0 : index
    %c0_11 = arith.constant 0 : index
    %8 = vector.load %arg5[%c0_10, %c0_11] : memref<6x32xf32, #tpu.memory_space<vmem>>, vector<6x32xf32>
    %cst = arith.constant dense<0.000000e+00> : vector<8x102xf32>
    %9 = tpu.matmul %1, %7, %cst {dimension_numbers = #tpu.dot_dimension_numbers<[1], [0], [0], [1], [0, 0, 1, 1], [], []>} : vector<8x32xf32>, vector<32x102xf32>, vector<8x102xf32> -> vector<8x102xf32>
    %cst_12 = arith.constant dense<0.000000e+00> : vector<6x8xf32>
    %10 = tpu.matmul %8, %3, %cst_12 {dimension_numbers = #tpu.dot_dimension_numbers<[1], [0], [0], [1], [0, 0, 1, 1], [], []>} : vector<6x32xf32>, vector<32x8xf32>, vector<6x8xf32> -> vector<6x8xf32>
    %c1_i32 = arith.constant 1 : i32
    %11 = vector.broadcast %c1_i32 : i32 to vector<8x8xi32>
    %12 = arith.cmpi eq, %6, %11 : vector<8x8xi32>
    %c2_i32 = arith.constant 2 : i32
    %13 = vector.broadcast %c2_i32 : i32 to vector<8x8xi32>
    %14 = arith.cmpi eq, %6, %13 : vector<8x8xi32>
    %c3_i32 = arith.constant 3 : i32
    %15 = vector.broadcast %c3_i32 : i32 to vector<8x8xi32>
    %16 = arith.cmpi eq, %6, %15 : vector<8x8xi32>
    %c0_i32 = arith.constant 0 : i32
    %17 = vector.broadcast %c0_i32 : i32 to vector<8x8xi32>
    %18 = arith.cmpi sle, %6, %17 : vector<8x8xi32>
    %cst_13 = arith.constant 0.000000e+00 : f32
    %19 = vector.broadcast %cst_13 : f32 to vector<8x8xf32>
    %20 = vector.extract_strided_slice %9 {offsets = [0, 96], sizes = [8, 1], strides = [1, 1]} : vector<8x102xf32> to vector<8x1xf32>
    %21 = vector.extract_strided_slice %10 {offsets = [0, 0], sizes = [1, 8], strides = [1, 1]} : vector<6x8xf32> to vector<1x8xf32>
    %22 = vector.broadcast %20 : vector<8x1xf32> to vector<8x8xf32>
    %23 = vector.broadcast %21 : vector<1x8xf32> to vector<8x8xf32>
    %24 = arith.addf %22, %23 : vector<8x8xf32>
    %cst_14 = arith.constant 2.000000e-01 : f32
    %25 = vector.broadcast %cst_14 : f32 to vector<8x8xf32>
    %26 = arith.mulf %25, %24 : vector<8x8xf32>
    %27 = arith.maximumf %24, %26 : vector<8x8xf32>
    %cst_15 = arith.constant 0.000000e+00 : f32
    %28 = vector.broadcast %cst_15 : f32 to vector<8x8xf32>
    %29 = arith.select %12, %27, %28 : vector<8x8xi1>, vector<8x8xf32>
    %30 = arith.addf %19, %29 : vector<8x8xf32>
    %31 = vector.extract_strided_slice %9 {offsets = [0, 97], sizes = [8, 1], strides = [1, 1]} : vector<8x102xf32> to vector<8x1xf32>
    %32 = vector.extract_strided_slice %10 {offsets = [1, 0], sizes = [1, 8], strides = [1, 1]} : vector<6x8xf32> to vector<1x8xf32>
    %33 = vector.broadcast %31 : vector<8x1xf32> to vector<8x8xf32>
    %34 = vector.broadcast %32 : vector<1x8xf32> to vector<8x8xf32>
    %35 = arith.addf %33, %34 : vector<8x8xf32>
    %cst_16 = arith.constant 2.000000e-01 : f32
    %36 = vector.broadcast %cst_16 : f32 to vector<8x8xf32>
    %37 = arith.mulf %36, %35 : vector<8x8xf32>
    %38 = arith.maximumf %35, %37 : vector<8x8xf32>
    %cst_17 = arith.constant 0.000000e+00 : f32
    %39 = vector.broadcast %cst_17 : f32 to vector<8x8xf32>
    %40 = arith.select %14, %38, %39 : vector<8x8xi1>, vector<8x8xf32>
    %41 = arith.addf %30, %40 : vector<8x8xf32>
    %42 = vector.extract_strided_slice %9 {offsets = [0, 32], sizes = [8, 16], strides = [1, 1]} : vector<8x102xf32> to vector<8x16xf32>
    %43 = vector.extract_strided_slice %9 {offsets = [0, 98], sizes = [8, 1], strides = [1, 1]} : vector<8x102xf32> to vector<8x1xf32>
    %44 = vector.extract_strided_slice %10 {offsets = [2, 0], sizes = [1, 8], strides = [1, 1]} : vector<6x8xf32> to vector<1x8xf32>
    %45 = vector.broadcast %43 : vector<8x1xf32> to vector<8x8xf32>
    %46 = vector.broadcast %44 : vector<1x8xf32> to vector<8x8xf32>
    %47 = arith.addf %45, %46 : vector<8x8xf32>
    %cst_18 = arith.constant 2.000000e-01 : f32
    %48 = vector.broadcast %cst_18 : f32 to vector<8x8xf32>
    %49 = arith.mulf %48, %47 : vector<8x8xf32>
    %50 = arith.maximumf %47, %49 : vector<8x8xf32>
    %cst_19 = arith.constant 0.000000e+00 : f32
    %51 = vector.broadcast %cst_19 : f32 to vector<8x8xf32>
    %52 = arith.select %16, %50, %51 : vector<8x8xi1>, vector<8x8xf32>
    %53 = arith.addf %41, %52 : vector<8x8xf32>
    %cst_20 = arith.constant -1.000000e+30 : f32
    %54 = vector.broadcast %cst_20 : f32 to vector<8x8xf32>
    %55 = arith.select %18, %54, %53 : vector<8x8xi1>, vector<8x8xf32>
    %cst_21 = arith.constant dense<0xFF800000> : vector<8xf32>
    %56 = vector.multi_reduction <maximumf>, %55, %cst_21 [0] : vector<8x8xf32> to vector<8xf32>
    %57 = vector.shape_cast %56 : vector<8xf32> to vector<1x8xf32>
    %58 = vector.broadcast %57 : vector<1x8xf32> to vector<8x8xf32>
    %59 = arith.subf %55, %58 : vector<8x8xf32>
    %60 = math.exp %59 : vector<8x8xf32>
    %cst_22 = arith.constant dense<0.000000e+00> : vector<8xf32>
    %61 = vector.multi_reduction <add>, %60, %cst_22 [0] : vector<8x8xf32> to vector<8xf32>
    %62 = vector.shape_cast %61 : vector<8xf32> to vector<1x8xf32>
    %63 = tpu.reciprocal %62 : vector<1x8xf32> -> vector<1x8xf32>
    %64 = vector.broadcast %63 : vector<1x8xf32> to vector<8x8xf32>
    %65 = arith.mulf %60, %64 : vector<8x8xf32>
    %cst_23 = arith.constant dense<0.000000e+00> : vector<8x16xf32>
    %66 = tpu.matmul %65, %42, %cst_23 {dimension_numbers = #tpu.dot_dimension_numbers<[1], [0], [0], [1], [0, 0, 1, 1], [], []>} : vector<8x8xf32>, vector<8x16xf32>, vector<8x16xf32> -> vector<8x16xf32>
    %cst_24 = arith.constant 0.000000e+00 : f32
    %67 = vector.broadcast %cst_24 : f32 to vector<8x8xf32>
    %68 = vector.extract_strided_slice %9 {offsets = [0, 99], sizes = [8, 1], strides = [1, 1]} : vector<8x102xf32> to vector<8x1xf32>
    %69 = vector.extract_strided_slice %10 {offsets = [3, 0], sizes = [1, 8], strides = [1, 1]} : vector<6x8xf32> to vector<1x8xf32>
    %70 = vector.broadcast %68 : vector<8x1xf32> to vector<8x8xf32>
    %71 = vector.broadcast %69 : vector<1x8xf32> to vector<8x8xf32>
    %72 = arith.addf %70, %71 : vector<8x8xf32>
    %cst_25 = arith.constant 2.000000e-01 : f32
    %73 = vector.broadcast %cst_25 : f32 to vector<8x8xf32>
    %74 = arith.mulf %73, %72 : vector<8x8xf32>
    %75 = arith.maximumf %72, %74 : vector<8x8xf32>
    %cst_26 = arith.constant 0.000000e+00 : f32
    %76 = vector.broadcast %cst_26 : f32 to vector<8x8xf32>
    %77 = arith.select %12, %75, %76 : vector<8x8xi1>, vector<8x8xf32>
    %78 = arith.addf %67, %77 : vector<8x8xf32>
    %79 = vector.extract_strided_slice %9 {offsets = [0, 100], sizes = [8, 1], strides = [1, 1]} : vector<8x102xf32> to vector<8x1xf32>
    %80 = vector.extract_strided_slice %10 {offsets = [4, 0], sizes = [1, 8], strides = [1, 1]} : vector<6x8xf32> to vector<1x8xf32>
    %81 = vector.broadcast %79 : vector<8x1xf32> to vector<8x8xf32>
    %82 = vector.broadcast %80 : vector<1x8xf32> to vector<8x8xf32>
    %83 = arith.addf %81, %82 : vector<8x8xf32>
    %cst_27 = arith.constant 2.000000e-01 : f32
    %84 = vector.broadcast %cst_27 : f32 to vector<8x8xf32>
    %85 = arith.mulf %84, %83 : vector<8x8xf32>
    %86 = arith.maximumf %83, %85 : vector<8x8xf32>
    %cst_28 = arith.constant 0.000000e+00 : f32
    %87 = vector.broadcast %cst_28 : f32 to vector<8x8xf32>
    %88 = arith.select %14, %86, %87 : vector<8x8xi1>, vector<8x8xf32>
    %89 = arith.addf %78, %88 : vector<8x8xf32>
    %90 = vector.extract_strided_slice %9 {offsets = [0, 80], sizes = [8, 16], strides = [1, 1]} : vector<8x102xf32> to vector<8x16xf32>
    %91 = vector.extract_strided_slice %9 {offsets = [0, 101], sizes = [8, 1], strides = [1, 1]} : vector<8x102xf32> to vector<8x1xf32>
    %92 = vector.extract_strided_slice %10 {offsets = [5, 0], sizes = [1, 8], strides = [1, 1]} : vector<6x8xf32> to vector<1x8xf32>
    %93 = vector.broadcast %91 : vector<8x1xf32> to vector<8x8xf32>
    %94 = vector.broadcast %92 : vector<1x8xf32> to vector<8x8xf32>
    %95 = arith.addf %93, %94 : vector<8x8xf32>
    %cst_29 = arith.constant 2.000000e-01 : f32
    %96 = vector.broadcast %cst_29 : f32 to vector<8x8xf32>
    %97 = arith.mulf %96, %95 : vector<8x8xf32>
    %98 = arith.maximumf %95, %97 : vector<8x8xf32>
    %cst_30 = arith.constant 0.000000e+00 : f32
    %99 = vector.broadcast %cst_30 : f32 to vector<8x8xf32>
    %100 = arith.select %16, %98, %99 : vector<8x8xi1>, vector<8x8xf32>
    %101 = arith.addf %89, %100 : vector<8x8xf32>
    %cst_31 = arith.constant -1.000000e+30 : f32
    %102 = vector.broadcast %cst_31 : f32 to vector<8x8xf32>
    %103 = arith.select %18, %102, %101 : vector<8x8xi1>, vector<8x8xf32>
    %cst_32 = arith.constant dense<0xFF800000> : vector<8xf32>
    %104 = vector.multi_reduction <maximumf>, %103, %cst_32 [0] : vector<8x8xf32> to vector<8xf32>
    %105 = vector.shape_cast %104 : vector<8xf32> to vector<1x8xf32>
    %106 = vector.broadcast %105 : vector<1x8xf32> to vector<8x8xf32>
    %107 = arith.subf %103, %106 : vector<8x8xf32>
    %108 = math.exp %107 : vector<8x8xf32>
    %cst_33 = arith.constant dense<0.000000e+00> : vector<8xf32>
    %109 = vector.multi_reduction <add>, %108, %cst_33 [0] : vector<8x8xf32> to vector<8xf32>
    %110 = vector.shape_cast %109 : vector<8xf32> to vector<1x8xf32>
    %111 = tpu.reciprocal %110 : vector<1x8xf32> -> vector<1x8xf32>
    %112 = vector.broadcast %111 : vector<1x8xf32> to vector<8x8xf32>
    %113 = arith.mulf %108, %112 : vector<8x8xf32>
    %cst_34 = arith.constant dense<0.000000e+00> : vector<8x16xf32>
    %114 = tpu.matmul %113, %90, %cst_34 {dimension_numbers = #tpu.dot_dimension_numbers<[1], [0], [0], [1], [0, 0, 1, 1], [], []>} : vector<8x8xf32>, vector<8x16xf32>, vector<8x16xf32> -> vector<8x16xf32>
    %115 = tpu.concatenate %66, %114 in 1 : vector<8x16xf32>, vector<8x16xf32> -> vector<8x32xf32>
    %cst_35 = arith.constant 0.000000e+00 : f32
    %116 = vector.broadcast %cst_35 : f32 to vector<8x32xf32>
    %117 = arith.maximumf %115, %116 : vector<8x32xf32>
    %c0_36 = arith.constant 0 : index
    %c0_37 = arith.constant 0 : index
    %c0_38 = arith.constant 0 : index
    %118 = vector.load %arg6[%c0_36, %c0_37, %c0_38] : memref<1x8x32xf32, #tpu.memory_space<vmem>>, vector<1x8x32xf32>
    %119 = vector.shape_cast %118 : vector<1x8x32xf32> to vector<8x32xf32>
    %120 = vector.shape_cast %117 : vector<8x32xf32> to vector<1x8x32xf32>
    tpu.vector_store %arg6[%c0_36, %c0_37, %c0_38], %120 {strides = array<i32>} : memref<1x8x32xf32, #tpu.memory_space<vmem>>, vector<1x8x32xf32>,
    return
  }
  func.func @transform_0(%arg0: i32) -> (i32, i32, i32) {
    %c0_i32 = arith.constant 0 : i32
    %c0_i32_0 = arith.constant 0 : i32
    %c0_i32_1 = arith.constant 0 : i32
    return %arg0, %c0_i32, %c0_i32_0 : i32, i32, i32
  }
  func.func @transform_1(%arg0: i32) -> (i32, i32, i32) {
    %c0_i32 = arith.constant 0 : i32
    %c0_i32_0 = arith.constant 0 : i32
    %c0_i32_1 = arith.constant 0 : i32
    return %arg0, %c0_i32, %c0_i32_0 : i32, i32, i32
  }
  func.func @transform_2(%arg0: i32) -> (i32, i32, i32) {
    %c0_i32 = arith.constant 0 : i32
    %c0_i32_0 = arith.constant 0 : i32
    %c0_i32_1 = arith.constant 0 : i32
    return %arg0, %c0_i32, %c0_i32_0 : i32, i32, i32
  }
  func.func @transform_3(%arg0: i32) -> (i32, i32) {
    %c0_i32 = arith.constant 0 : i32
    %c0_i32_0 = arith.constant 0 : i32
    %c0_i32_1 = arith.constant 0 : i32
    return %c0_i32, %c0_i32_0 : i32, i32
  }
  func.func @transform_4(%arg0: i32) -> (i32, i32) {
    %c0_i32 = arith.constant 0 : i32
    %c0_i32_0 = arith.constant 0 : i32
    %c0_i32_1 = arith.constant 0 : i32
    return %c0_i32, %c0_i32_0 : i32, i32
  }
  func.func @transform_5(%arg0: i32) -> (i32, i32, i32) {
    %c0_i32 = arith.constant 0 : i32
    %c0_i32_0 = arith.constant 0 : i32
    %c0_i32_1 = arith.constant 0 : i32
    return %arg0, %c0_i32, %c0_i32_0 : i32, i32, i32
  }
}

</mosaic_0001>

<llo_original>
// kernel: tpu_custom_call.1
$region0: #{tpu_custom_call.1}
  #allocation0 [shape = 'u32[]', space=smem, size = 0x4, offset = 0x4, fixed_abs, tag = 'smem constant byte address 0x4 - core index']
  #allocation1 [shape = 'u32[144,128]{1,0:T(1,128)}', space=vmem, size = 0x12000, scoped, tag = 'internal scratch']
  %s0 = inlined_call_operand.vmem [shape: f32[2,8,32], index: 0, kind: input, shape index: {}]
  %s1 = inlined_call_operand.vmem [shape: f32[2,32,8], index: 1, kind: input, shape index: {}]
  %s2 = inlined_call_operand.vmem [shape: s8[2,8,8], index: 2, kind: input, shape index: {}]
  %s3 = inlined_call_operand.vmem [shape: f32[32,102], index: 3, kind: input, shape index: {}]
  %s4 = inlined_call_operand.vmem [shape: f32[6,32], index: 4, kind: input, shape index: {}]
  %s5 = inlined_call_operand.hbm [shape: f32[2,8,32], index: 5, kind: output, shape index: {}]
  %s6 = sld [smem:[#allocation0]]
  $region53: #{tpu_custom_call.1} parent=0
    _
  %s8 = ssub.s32 1, %s6
  %s9 = scalar_select 0, %s8, %s6
  $region1: #{tpu_custom_call.1} parent=0
    #allocation2 [shape = 'u8[8192]{0}', space=vmem, size = 0x2000, scoped, tag = 'output window, operand 0']
    #allocation3 [shape = 's32[2]{0}', space=sflag, size = 0x8, scoped, tag = 'scoped memory for tpu_custom_call.1']
    %10 = vsyncpa [#allocation3], 0
    %s11 = scalar_lea.sflag [#allocation3], 1
    %12 = vsyncpa %s11, 0
    loop: start=0, step=1, limit=4
    $region2: #{tpu_custom_call.1} parent=1 // loop_pre_header
      _
    $region3: #{tpu_custom_call.1} parent=1 // loop_header
      %s14 = sphi 0, %s18
      %p15 = scmp.ge.s32.totalorder %s14, 4
      %s24 = sphi 0, %s26
      %s27 = sphi 0, %s24
      %s28 = sphi 0, %s27
      %s44 = sphi 0, %s28
      %s50 = sphi 0, %s52
      %s53 = sphi 0, %s50
      %s54 = sphi 0, %s53
      %s70 = sphi 0, %s54
      %s76 = sphi 0, %s78
      %s79 = sphi 0, %s76
      %s80 = sphi 0, %s79
      %s96 = sphi 0, %s80
      %s100 = sphi 0, %s100
      %s102 = sphi 0, %s100
      %s103 = sphi 0, %s102
      %s117 = sphi 0, %s103
      %s121 = sphi 0, %s121
      %s123 = sphi 0, %s121
      %s124 = sphi 0, %s123
      %s138 = sphi 0, %s124
      %s144 = sphi 0, %s146
      %s147 = sphi 0, %s144
      %s148 = sphi 0, %s147
      %s164 = sphi 0, %s148
    $region4: #{tpu_custom_call.1} parent=1 // loop_header_branch
      %17 = sbr.rel (%p15) target = $region8
    $region5: #{tpu_custom_call.1} parent=1 // loop_body
      %s19 = ssub.s32 %s14, 1
      %s20 = ssub.s32 %s14, 2
      %s21 = sadd.s32 %s14, 1
      %s22 = ssub.s32 %s14, %s21
      %p23 = scmp.eq.s32.totalorder %s22, 0
      %s25 = sadd.s32 %s24, 1
      %s26 = scalar_select %p23, %s24, %s25
      %p29 = pneg %p23
      %p30 = scmp.eq.s32.totalorder %s14, 1
      %p31 = por %p29, %p30
      %p32 = scmp.ne.s32.totalorder %s24, %s27
      %p33 = scmp.eq.s32.totalorder %s14, 0
      %p34 = por %p32, %p33
      %p35 = scmp.ne.s32.totalorder %s24, %s27
      %p36 = scmp.eq.s32.totalorder %s19, 1
      %p37 = por %p35, %p36
      %p38 = scmp.ne.s32.totalorder %s27, %s28
      %p39 = scmp.eq.s32.totalorder %s19, 0
      %p40 = por %p38, %p39
      %p41 = scmp.ne.s32.totalorder %s27, %s28
      %p42 = scmp.eq.s32.totalorder %s20, 1
      %p43 = por %p41, %p42
      %p45 = scmp.ne.s32.totalorder %s28, %s44
      %p46 = scmp.eq.s32.totalorder %s20, 0
      %p47 = por %p45, %p46
      %s48 = ssub.s32 %s14, %s21
      %p49 = scmp.eq.s32.totalorder %s48, 0
      %s51 = sadd.s32 %s50, 1
      %s52 = scalar_select %p49, %s50, %s51
      %p55 = pneg %p49
      %p56 = scmp.eq.s32.totalorder %s14, 1
      %p57 = por %p55, %p56
      %p58 = scmp.ne.s32.totalorder %s50, %s53
      %p59 = scmp.eq.s32.totalorder %s14, 0
      %p60 = por %p58, %p59
      %p61 = scmp.ne.s32.totalorder %s50, %s53
      %p62 = scmp.eq.s32.totalorder %s19, 1
      %p63 = por %p61, %p62
      %p64 = scmp.ne.s32.totalorder %s53, %s54
      %p65 = scmp.eq.s32.totalorder %s19, 0
      %p66 = por %p64, %p65
      %p67 = scmp.ne.s32.totalorder %s53, %s54
      %p68 = scmp.eq.s32.totalorder %s20, 1
      %p69 = por %p67, %p68
      %p71 = scmp.ne.s32.totalorder %s54, %s70
      %p72 = scmp.eq.s32.totalorder %s20, 0
      %p73 = por %p71, %p72
      %s74 = ssub.s32 %s14, %s21
      %p75 = scmp.eq.s32.totalorder %s74, 0
      %s77 = sadd.s32 %s76, 1
      %s78 = scalar_select %p75, %s76, %s77
      %p81 = pneg %p75
      %p82 = scmp.eq.s32.totalorder %s14, 1
      %p83 = por %p81, %p82
      %p84 = scmp.ne.s32.totalorder %s76, %s79
      %p85 = scmp.eq.s32.totalorder %s14, 0
      %p86 = por %p84, %p85
      %p87 = scmp.ne.s32.totalorder %s76, %s79
      %p88 = scmp.eq.s32.totalorder %s19, 1
      %p89 = por %p87, %p88
      %p90 = scmp.ne.s32.totalorder %s79, %s80
      %p91 = scmp.eq.s32.totalorder %s19, 0
      %p92 = por %p90, %p91
      %p93 = scmp.ne.s32.totalorder %s79, %s80
      %p94 = scmp.eq.s32.totalorder %s20, 1
      %p95 = por %p93, %p94
      %p97 = scmp.ne.s32.totalorder %s80, %s96
      %p98 = scmp.eq.s32.totalorder %s20, 0
      %p99 = por %p97, %p98
      %s101 = sadd.s32 %s100, 1
      %p104 = scmp.eq.s32.totalorder %s14, 1
      %p105 = scmp.ne.s32.totalorder %s100, %s102
      %p106 = scmp.eq.s32.totalorder %s14, 0
      %p107 = por %p105, %p106
      %p108 = scmp.ne.s32.totalorder %s100, %s102
      %p109 = scmp.eq.s32.totalorder %s19, 1
      %p110 = por %p108, %p109
      %p111 = scmp.ne.s32.totalorder %s102, %s103
      %p112 = scmp.eq.s32.totalorder %s19, 0
      %p113 = por %p111, %p112
      %p114 = scmp.ne.s32.totalorder %s102, %s103
      %p115 = scmp.eq.s32.totalorder %s20, 1
      %p116 = por %p114, %p115
      %p118 = scmp.ne.s32.totalorder %s103, %s117
      %p119 = scmp.eq.s32.totalorder %s20, 0
      %p120 = por %p118, %p119
      %s122 = sadd.s32 %s121, 1
      %p125 = scmp.eq.s32.totalorder %s14, 1
      %p126 = scmp.ne.s32.totalorder %s121, %s123
      %p127 = scmp.eq.s32.totalorder %s14, 0
      %p128 = por %p126, %p127
      %p129 = scmp.ne.s32.totalorder %s121, %s123
      %p130 = scmp.eq.s32.totalorder %s19, 1
      %p131 = por %p129, %p130
      %p132 = scmp.ne.s32.totalorder %s123, %s124
      %p133 = scmp.eq.s32.totalorder %s19, 0
      %p134 = por %p132, %p133
      %p135 = scmp.ne.s32.totalorder %s123, %s124
      %p136 = scmp.eq.s32.totalorder %s20, 1
      %p137 = por %p135, %p136
      %p139 = scmp.ne.s32.totalorder %s124, %s138
      %p140 = scmp.eq.s32.totalorder %s20, 0
      %p141 = por %p139, %p140
      %s142 = ssub.s32 %s14, %s21
      %p143 = scmp.eq.s32.totalorder %s142, 0
      %s145 = sadd.s32 %s144, 1
      %s146 = scalar_select %p143, %s144, %s145
      %p149 = pneg %p143
      %p150 = scmp.eq.s32.totalorder %s14, 1
      %p151 = por %p149, %p150
      %p152 = scmp.ne.s32.totalorder %s144, %s147
      %p153 = scmp.eq.s32.totalorder %s14, 0
      %p154 = por %p152, %p153
      %p155 = scmp.ne.s32.totalorder %s144, %s147
      %p156 = scmp.eq.s32.totalorder %s19, 1
      %p157 = por %p155, %p156
      %p158 = scmp.ne.s32.totalorder %s147, %s148
      %p159 = scmp.eq.s32.totalorder %s19, 0
      %p160 = por %p158, %p159
      %p161 = scmp.ne.s32.totalorder %s147, %s148
      %p162 = scmp.eq.s32.totalorder %s20, 1
      %p163 = por %p161, %p162
      %p165 = scmp.ne.s32.totalorder %s148, %s164
      %p166 = scmp.eq.s32.totalorder %s20, 0
      %p167 = por %p165, %p166
      %p168 = scmp.le.s32.totalorder 1, %s14
      %p169 = scmp.lt.s32.totalorder %s14, 3
      %p170 = pnand %p168, %p169
      %p171 = pneg %p170
      // Predicated region
      $region9: #{tpu_custom_call.1} parent=5 // pred_check
        _
      $region10: #{tpu_custom_call.1} parent=5 // pred_check_branch
        %173 = sbr.rel (%p170) target = $region12
      $region11: #{tpu_custom_call.1} parent=5 // pred_region
        %s174 = ssub.s32 %s14, 1
        // Predicated region
        $region13: #{tpu_custom_call.1} parent=11 // pred_check
          %p175 = pneg %p113
        $region14: #{tpu_custom_call.1} parent=11 // pred_check_branch
          %177 = sbr.rel (%p175) target = $region16
        $region15: #{tpu_custom_call.1} parent=11 // pred_region
          _
        $region16: #{tpu_custom_call.1} parent=11 // pred_fallthru
          _
        // Predicated region
        $region17: #{tpu_custom_call.1} parent=11 // pred_check
          %p178 = pneg %p134
        $region18: #{tpu_custom_call.1} parent=11 // pred_check_branch
          %180 = sbr.rel (%p178) target = $region20
        $region19: #{tpu_custom_call.1} parent=11 // pred_region
          _
        $region20: #{tpu_custom_call.1} parent=11 // pred_fallthru
          _
      $region12: #{tpu_custom_call.1} parent=5 // pred_fallthru
        _
      %p181 = scmp.lt.s32.totalorder %s14, 2
      // Predicated region
      $region21: #{tpu_custom_call.1} parent=5 // pred_check
        %p182 = pneg %p181
      $region22: #{tpu_custom_call.1} parent=5 // pred_check_branch
        %184 = sbr.rel (%p182) target = $region24
      $region23: #{tpu_custom_call.1} parent=5 // pred_region
        // Predicated region
        $region25: #{tpu_custom_call.1} parent=23 // pred_check
          %p185 = pneg %p34
        $region26: #{tpu_custom_call.1} parent=23 // pred_check_branch
          %187 = sbr.rel (%p185) target = $region28
        $region27: #{tpu_custom_call.1} parent=23 // pred_region
          %p188 = scmp.lt.s32.totalorder %s14, 1
          %s189 = scalar_select %p188, %s14, 1
          %s190 = smul.addr %s189, 8
          %s191 = scalar_lea.vmem %s0, %s190
        $region28: #{tpu_custom_call.1} parent=23 // pred_fallthru
          _
        // Predicated region
        $region29: #{tpu_custom_call.1} parent=23 // pred_check
          %p192 = pneg %p60
        $region30: #{tpu_custom_call.1} parent=23 // pred_check_branch
          %194 = sbr.rel (%p192) target = $region32
        $region31: #{tpu_custom_call.1} parent=23 // pred_region
          %p195 = scmp.lt.s32.totalorder %s14, 1
          %s196 = scalar_select %p195, %s14, 1
          %s197 = smul.addr %s196, 4
          %s198 = smul.addr %s197, 8
          %s199 = scalar_lea.vmem %s1, %s198
        $region32: #{tpu_custom_call.1} parent=23 // pred_fallthru
          _
        // Predicated region
        $region33: #{tpu_custom_call.1} parent=23 // pred_check
          %p200 = pneg %p86
        $region34: #{tpu_custom_call.1} parent=23 // pred_check_branch
          %202 = sbr.rel (%p200) target = $region36
        $region35: #{tpu_custom_call.1} parent=23 // pred_region
          %p203 = scmp.lt.s32.totalorder %s14, 1
          %s204 = scalar_select %p203, %s14, 1
          %s205 = smul.addr %s204, 2
          %s206 = scalar_lea.vmem %s2, %s205
        $region36: #{tpu_custom_call.1} parent=23 // pred_fallthru
          _
      $region24: #{tpu_custom_call.1} parent=5 // pred_fallthru
        _
      %p207 = scmp.le.s32.totalorder 1, %s14
      %p208 = scmp.lt.s32.totalorder %s14, 3
      %p209 = pnand %p207, %p208
      %p210 = pneg %p209
      // Predicated region
      $region37: #{tpu_custom_call.1} parent=5 // pred_check
        _
      $region38: #{tpu_custom_call.1} parent=5 // pred_check_branch
        %212 = sbr.rel (%p209) target = $region40
      $region39: #{tpu_custom_call.1} parent=5 // pred_region
        %s213 = ssub.s32 %s14, 1
        %p214 = scmp.lt.s32.totalorder %s19, 1
        %s215 = scalar_select %p214, %s19, 1
        %s216 = smul.addr %s215, 8
        %s217 = scalar_lea.vmem %s0, %s216
        %p218 = pneg %p40
        %p219 = pneg %p37
        %p220 = scmp.lt.s32.totalorder %s19, 1
        %s221 = scalar_select %p220, %s19, 1
        %s222 = smul.addr %s221, 4
        %s223 = smul.addr %s222, 8
        %s224 = scalar_lea.vmem %s1, %s223
        %p225 = pneg %p66
        %p226 = pneg %p63
        %p227 = scmp.lt.s32.totalorder %s19, 1
        %s228 = scalar_select %p227, %s19, 1
        %s229 = smul.addr %s228, 2
        %s230 = scalar_lea.vmem %s2, %s229
        %p231 = pneg %p92
        %p232 = pneg %p89
        %p233 = pneg %p113
        %p234 = pneg %p110
        %p235 = pneg %p134
        %p236 = pneg %p131
        %p237 = pneg %p160
        %p238 = pneg %p157
        %s239 = sand.u32 %s147, 1
        %s240 = scalar_lea.sflag [#allocation3], %s239
        %s241 = sand.u32 %s147, 1
        %s242 = smul.addr %s241, 8
        %s243 = scalar_lea.vmem [#allocation2], %s242
        %p244 = scmp.lt.s32.totalorder %s19, 1
        %s245 = scalar_select %p244, %s19, 1
        %s246 = smul.addr %s245, 8
        %s247 = scalar_lea.vmem %s0, %s246
        %p248 = scmp.lt.s32.totalorder %s19, 1
        %s249 = scalar_select %p248, %s19, 1
        %s250 = smul.addr %s249, 4
        %s251 = smul.addr %s250, 8
        %s252 = scalar_lea.vmem %s1, %s251
        %p253 = scmp.lt.s32.totalorder %s19, 1
        %s254 = scalar_select %p253, %s19, 1
        %s255 = smul.addr %s254, 2
        %s256 = scalar_lea.vmem %s2, %s255
        %v257 = vld [vmem:[%s247] sm:$0xff]
        %v258 = vld [vmem:[%s252] sm:$0xff]
        %v259 = vld [vmem:[%s252 + $0x8] sm:$0xff]
        %v260 = vld [vmem:[%s252 + $0x10] sm:$0xff]
        %v261 = vld [vmem:[%s252 + $0x18] sm:$0xff]
        %v262 = vld [vmem:[%s256] sm:$0x3]
        %v263 = vunpack.c.0.s8 %v262
        %v264 = vld [vmem:[%s3] sm:$0xff]
        %v265 = vld [vmem:[%s3 + $0x8] sm:$0xff]
        %v266 = vld [vmem:[%s3 + $0x10] sm:$0xff]
        %v267 = vld [vmem:[%s3 + $0x18] sm:$0xff]
        %v268 = vld [vmem:[%s4] sm:$0x3f]
        %vm269 = vcmask 261120
        %v271 = vsel %vm269, %v257, 0
        %273 = vmatprep.subr.mxu0 0.0
        %274 = vmatpush1.msra.mxu0 %v264
        %275 = vmatprep.subr.mxu0 0.0
        %276 = vmatpush1.msra.mxu0 %v265
        %277 = vmatprep.subr.mxu0 0.0
        %278 = vmatpush1.msra.mxu0 %v266
        %279 = vmatprep.subr.mxu0 0.0
        %280 = vmatpush1.msra.mxu0 %v267
        %281 = vmatprep.subr.mxu0 0.0
        %282 = vmatpush1.msra.mxu0 0.0
        %283 = vmatprep.subr.mxu0 0.0
        %284 = vmatpush1.msra.mxu0 0.0
        %285 = vmatprep.subr.mxu0 0.0
        %286 = vmatpush1.msra.mxu0 0.0
        %287 = vmatprep.subr.mxu0 0.0
        %288 = vmatpush1.msra.mxu0 0.0
        %289 = vmatprep.subr.mxu0 0.0
        %290 = vmatpush1.msra.mxu0 0.0
        %291 = vmatprep.subr.mxu0 0.0
        %292 = vmatpush1.msra.mxu0 0.0
        %293 = vmatprep.subr.mxu0 0.0
        %294 = vmatpush1.msra.mxu0 0.0
        %295 = vmatprep.subr.mxu0 0.0
        %296 = vmatpush1.msra.mxu0 0.0
        %297 = vmatprep.subr.mxu0 0.0
        %298 = vmatpush1.msra.mxu0 0.0
        %299 = vmatprep.subr.mxu0 0.0
        %300 = vmatpush1.msra.mxu0 0.0
        %301 = vmatprep.subr.mxu0 0.0
        %302 = vmatpush1.msra.mxu0 0.0
        %303 = vmatprep.subr.mxu0 0.0
        %304 = vmatpush1.msra.mxu0 0.0
        %305 = vmatprep.subr.mxu0 0.0
        %306 = vmatpush1.msra.mxu0 0.0
        %307 = vmatprep.subr.mxu0 0.0
        %308 = vmatpush1.msra.mxu0 0.0
        %309 = vmatprep.subr.mxu0 0.0
        %310 = vmatpush1.msra.mxu0 0.0
        %311 = vmatprep.subr.mxu0 0.0
        %312 = vmatpush1.msra.mxu0 0.0
        %313 = vmatprep.subr.mxu0 0.0
        %314 = vmatpush1.msra.mxu0 0.0
        %315 = vmatprep.subr.mxu0 0.0
        %316 = vmatpush1.msra.mxu0 0.0
        %317 = vmatprep.subr.mxu0 0.0
        %318 = vmatpush1.msra.mxu0 0.0
        %319 = vmatprep.subr.mxu0 0.0
        %320 = vmatpush1.msra.mxu0 0.0
        %321 = vmatprep.subr.mxu0 0.0
        %322 = vmatpush1.msra.mxu0 0.0
        %323 = vmatprep.subr.mxu0 0.0
        %324 = vmatpush1.msra.mxu0 0.0
        %325 = vmatprep.subr.mxu0 0.0
        %326 = vmatpush1.msra.mxu0 0.0
        %327 = vmatprep.subr.mxu0 0.0
        %328 = vmatpush1.msra.mxu0 0.0
        %329 = vmatprep.subr.mxu0 0.0
        %330 = vmatpush1.msra.mxu0 0.0
        %331 = vmatprep.subr.mxu0 0.0
        %332 = vmatpush1.msra.mxu0 0.0
        %333 = vmatprep.subr.mxu0 0.0
        %334 = vmatpush1.msra.mxu0 0.0
        %335 = vmatprep.subr.mxu0 0.0
        %336 = vmatpush1.msra.mxu0 0.0
        %337 = vmatprep.mubr.f32.mxu0 0.0
        %338 = vmatmul.mubr.f32.gmra.mrb[0].mxu0 %v271
        %v339 = vpop.f32.mrb[0].mxu0
        %v340 = vadd.f32 0.0, %v339
        %v341 = vpop.f32.mrb[0].mxu0
        %342 = vdwg.mxu0
        %v344 = vsel %vm269, %v268, 0
        %346 = vmatprep.subr.mxu0 0.0
        %347 = vmatpush1.msra.mxu0 %v258
        %348 = vmatprep.subr.mxu0 0.0
        %349 = vmatpush1.msra.mxu0 %v259
        %350 = vmatprep.subr.mxu0 0.0
        %351 = vmatpush1.msra.mxu0 %v260
        %352 = vmatprep.subr.mxu0 0.0
        %353 = vmatpush1.msra.mxu0 %v261
        %354 = vmatprep.subr.mxu0 0.0
        %355 = vmatpush1.msra.mxu0 0.0
        %356 = vmatprep.subr.mxu0 0.0
        %357 = vmatpush1.msra.mxu0 0.0
        %358 = vmatprep.subr.mxu0 0.0
        %359 = vmatpush1.msra.mxu0 0.0
        %360 = vmatprep.subr.mxu0 0.0
        %361 = vmatpush1.msra.mxu0 0.0
        %362 = vmatprep.subr.mxu0 0.0
        %363 = vmatpush1.msra.mxu0 0.0
        %364 = vmatprep.subr.mxu0 0.0
        %365 = vmatpush1.msra.mxu0 0.0
        %366 = vmatprep.subr.mxu0 0.0
        %367 = vmatpush1.msra.mxu0 0.0
        %368 = vmatprep.subr.mxu0 0.0
        %369 = vmatpush1.msra.mxu0 0.0
        %370 = vmatprep.subr.mxu0 0.0
        %371 = vmatpush1.msra.mxu0 0.0
        %372 = vmatprep.subr.mxu0 0.0
        %373 = vmatpush1.msra.mxu0 0.0
        %374 = vmatprep.subr.mxu0 0.0
        %375 = vmatpush1.msra.mxu0 0.0
        %376 = vmatprep.subr.mxu0 0.0
        %377 = vmatpush1.msra.mxu0 0.0
        %378 = vmatprep.subr.mxu0 0.0
        %379 = vmatpush1.msra.mxu0 0.0
        %380 = vmatprep.subr.mxu0 0.0
        %381 = vmatpush1.msra.mxu0 0.0
        %382 = vmatprep.subr.mxu0 0.0
        %383 = vmatpush1.msra.mxu0 0.0
        %384 = vmatprep.subr.mxu0 0.0
        %385 = vmatpush1.msra.mxu0 0.0
        %386 = vmatprep.subr.mxu0 0.0
        %387 = vmatpush1.msra.mxu0 0.0
        %388 = vmatprep.subr.mxu0 0.0
        %389 = vmatpush1.msra.mxu0 0.0
        %390 = vmatprep.subr.mxu0 0.0
        %391 = vmatpush1.msra.mxu0 0.0
        %392 = vmatprep.subr.mxu0 0.0
        %393 = vmatpush1.msra.mxu0 0.0
        %394 = vmatprep.subr.mxu0 0.0
        %395 = vmatpush1.msra.mxu0 0.0
        %396 = vmatprep.subr.mxu0 0.0
        %397 = vmatpush1.msra.mxu0 0.0
        %398 = vmatprep.subr.mxu0 0.0
        %399 = vmatpush1.msra.mxu0 0.0
        %400 = vmatprep.subr.mxu0 0.0
        %401 = vmatpush1.msra.mxu0 0.0
        %402 = vmatprep.subr.mxu0 0.0
        %403 = vmatpush1.msra.mxu0 0.0
        %404 = vmatprep.subr.mxu0 0.0
        %405 = vmatpush1.msra.mxu0 0.0
        %406 = vmatprep.subr.mxu0 0.0
        %407 = vmatpush1.msra.mxu0 0.0
        %408 = vmatprep.subr.mxu0 0.0
        %409 = vmatpush1.msra.mxu0 0.0
        %410 = vmatprep.mubr.f32.mxu0 0.0
        %411 = vmatmul.mubr.f32.gmra.mrb[0].mxu0 %v344
        %v412 = vpop.f32.mrb[0].mxu0
        %v413 = vadd.f32 0.0, %v412
        %v414 = vpop.f32.mrb[0].mxu0
        %415 = vdwg.mxu0
        %vm416 = vcmp.eq.s32.totalorder %v263, 1
        %vm417 = vcmp.eq.s32.totalorder %v263, 2
        %vm418 = vcmp.eq.s32.totalorder %v263, 3
        %vm419 = vcmp.le.s32.totalorder %v263, 0
        %421 = vset.pattern.permute.xlu0 96
        %422 = vperm.xlu0 %421, %v340
        %v423 = vpop.permute.xlu0 %422
        %v425 = vlaneseq
        %v426 = vshrl.u32 %v425, 7
        %v427 = vsub.s32 0, %v426
        %v428 = vrot.slane %v413, %v427
        %v429 = vadd.f32 %v423, %v428
        %v430 = vmul.f32 %v429, 0.2
        %v431 = vmax.f32 %v429, %v430
        %v432 = vsel %vm416, %v431, 0.0
        %v433 = vadd.f32 %v432, 0.0
        %434 = vset.pattern.permute.xlu0 97
        %435 = vperm.xlu0 %434, %v340
        %v436 = vpop.permute.xlu0 %435
        %v438 = vlaneseq
        %v439 = vshrl.u32 %v438, 7
        %v440 = vsub.s32 1, %v439
        %v441 = vrot.slane %v413, %v440
        %v442 = vadd.f32 %v436, %v441
        %v443 = vmul.f32 %v442, 0.2
        %v444 = vmax.f32 %v442, %v443
        %v445 = vsel %vm417, %v444, 0.0
        %v446 = vadd.f32 %v433, %v445
        %447 = vset.pattern.permute.xlu0 98
        %448 = vperm.xlu0 %447, %v340
        %v449 = vpop.permute.xlu0 %448
        %v451 = vlaneseq
        %v452 = vshrl.u32 %v451, 7
        %v453 = vsub.s32 2, %v452
        %v454 = vrot.slane %v413, %v453
        %v455 = vadd.f32 %v449, %v454
        %v456 = vmul.f32 %v455, 0.2
        %v457 = vmax.f32 %v455, %v456
        %v458 = vsel %vm418, %v457, 0.0
        %v459 = vadd.f32 %v446, %v458
        %v460 = vsel %vm419, -1e+30, %v459
        %vm461 = vcmask 64512
        %v462 = vsel %vm461, %v460, -inf
        %v463 = vrot.slane %v462, 4
        %v464 = vmax.f32 %v462, %v463
        %v465 = vrot.slane %v464, 2
        %v466 = vmax.f32 %v464, %v465
        %v467 = vrot.slane %v466, 1
        %v468 = vmax.f32 %v466, %v467
        %v469 = vsub.f32 %v460, %v468
        %v470 = vmul.f32 %v469, 1.442695
        %v471 = vpow.pop %v470
        %v472 = vsel %vm461, %v471, 0.0
        %v473 = vrot.slane %v472, 4
        %v474 = vadd.f32 %v472, %v473
        %v475 = vrot.slane %v474, 2
        %v476 = vadd.f32 %v474, %v475
        %v477 = vrot.slane %v476, 1
        %v478 = vadd.f32 %v476, %v477
        %v479 = vrcp.pop %v478
        %v480 = vmul.f32 %v471, %v479
        %481 = vrot.lane.b32.xlu0 %v340, 96
        %v482 = vpop.permute.xlu0 %481
        %v485 = vsel %vm461, %v480, 0
        %487 = vmatprep.subr.mxu0 0.0
        %488 = vmatpush1.msra.mxu0 %v482
        %489 = vmatprep.subr.mxu0 0.0
        %490 = vmatpush1.msra.mxu0 0.0
        %491 = vmatprep.subr.mxu0 0.0
        %492 = vmatpush1.msra.mxu0 0.0
        %493 = vmatprep.subr.mxu0 0.0
        %494 = vmatpush1.msra.mxu0 0.0
        %495 = vmatprep.subr.mxu0 0.0
        %496 = vmatpush1.msra.mxu0 0.0
        %497 = vmatprep.subr.mxu0 0.0
        %498 = vmatpush1.msra.mxu0 0.0
        %499 = vmatprep.subr.mxu0 0.0
        %500 = vmatpush1.msra.mxu0 0.0
        %501 = vmatprep.subr.mxu0 0.0
        %502 = vmatpush1.msra.mxu0 0.0
        %503 = vmatprep.subr.mxu0 0.0
        %504 = vmatpush1.msra.mxu0 0.0
        %505 = vmatprep.subr.mxu0 0.0
        %506 = vmatpush1.msra.mxu0 0.0
        %507 = vmatprep.subr.mxu0 0.0
        %508 = vmatpush1.msra.mxu0 0.0
        %509 = vmatprep.subr.mxu0 0.0
        %510 = vmatpush1.msra.mxu0 0.0
        %511 = vmatprep.subr.mxu0 0.0
        %512 = vmatpush1.msra.mxu0 0.0
        %513 = vmatprep.subr.mxu0 0.0
        %514 = vmatpush1.msra.mxu0 0.0
        %515 = vmatprep.subr.mxu0 0.0
        %516 = vmatpush1.msra.mxu0 0.0
        %517 = vmatprep.subr.mxu0 0.0
        %518 = vmatpush1.msra.mxu0 0.0
        %519 = vmatprep.subr.mxu0 0.0
        %520 = vmatpush1.msra.mxu0 0.0
        %521 = vmatprep.subr.mxu0 0.0
        %522 = vmatpush1.msra.mxu0 0.0
        %523 = vmatprep.subr.mxu0 0.0
        %524 = vmatpush1.msra.mxu0 0.0
        %525 = vmatprep.subr.mxu0 0.0
        %526 = vmatpush1.msra.mxu0 0.0
        %527 = vmatprep.subr.mxu0 0.0
        %528 = vmatpush1.msra.mxu0 0.0
        %529 = vmatprep.subr.mxu0 0.0
        %530 = vmatpush1.msra.mxu0 0.0
        %531 = vmatprep.subr.mxu0 0.0
        %532 = vmatpush1.msra.mxu0 0.0
        %533 = vmatprep.subr.mxu0 0.0
        %534 = vmatpush1.msra.mxu0 0.0
        %535 = vmatprep.subr.mxu0 0.0
        %536 = vmatpush1.msra.mxu0 0.0
        %537 = vmatprep.subr.mxu0 0.0
        %538 = vmatpush1.msra.mxu0 0.0
        %539 = vmatprep.subr.mxu0 0.0
        %540 = vmatpush1.msra.mxu0 0.0
        %541 = vmatprep.subr.mxu0 0.0
        %542 = vmatpush1.msra.mxu0 0.0
        %543 = vmatprep.subr.mxu0 0.0
        %544 = vmatpush1.msra.mxu0 0.0
        %545 = vmatprep.subr.mxu0 0.0
        %546 = vmatpush1.msra.mxu0 0.0
        %547 = vmatprep.subr.mxu0 0.0
        %548 = vmatpush1.msra.mxu0 0.0
        %549 = vmatprep.subr.mxu0 0.0
        %550 = vmatpush1.msra.mxu0 0.0
        %551 = vmatprep.mubr.f32.mxu0 0.0
        %552 = vmatmul.mubr.f32.gmra.mrb[0].mxu0 %v485
        %v553 = vpop.f32.mrb[0].mxu0
        %v554 = vadd.f32 0.0, %v553
        %v555 = vpop.f32.mrb[0].mxu0
        %556 = vdwg.mxu0
        %557 = vset.pattern.permute.xlu0 99
        %558 = vperm.xlu0 %557, %v340
        %v559 = vpop.permute.xlu0 %558
        %v561 = vlaneseq
        %v562 = vshrl.u32 %v561, 7
        %v563 = vsub.s32 3, %v562
        %v564 = vrot.slane %v413, %v563
        %v565 = vadd.f32 %v559, %v564
        %v566 = vmul.f32 %v565, 0.2
        %v567 = vmax.f32 %v565, %v566
        %v568 = vsel %vm416, %v567, 0.0
        %v569 = vadd.f32 %v568, 0.0
        %570 = vset.pattern.permute.xlu0 100
        %571 = vperm.xlu0 %570, %v340
        %v572 = vpop.permute.xlu0 %571
        %v574 = vlaneseq
        %v575 = vshrl.u32 %v574, 7
        %v576 = vsub.s32 4, %v575
        %v577 = vrot.slane %v413, %v576
        %v578 = vadd.f32 %v572, %v577
        %v579 = vmul.f32 %v578, 0.2
        %v580 = vmax.f32 %v578, %v579
        %v581 = vsel %vm417, %v580, 0.0
        %v582 = vadd.f32 %v569, %v581
        %583 = vset.pattern.permute.xlu0 101
        %584 = vperm.xlu0 %583, %v340
        %v585 = vpop.permute.xlu0 %584
        %v587 = vlaneseq
        %v588 = vshrl.u32 %v587, 7
        %v589 = vsub.s32 5, %v588
        %v590 = vrot.slane %v413, %v589
        %v591 = vadd.f32 %v585, %v590
        %v592 = vmul.f32 %v591, 0.2
        %v593 = vmax.f32 %v591, %v592
        %v594 = vsel %vm418, %v593, 0.0
        %v595 = vadd.f32 %v582, %v594
        %v596 = vsel %vm419, -1e+30, %v595
        %v597 = vsel %vm461, %v596, -inf
        %v598 = vrot.slane %v597, 4
        %v599 = vmax.f32 %v597, %v598
        %v600 = vrot.slane %v599, 2
        %v601 = vmax.f32 %v599, %v600
        %v602 = vrot.slane %v601, 1
        %v603 = vmax.f32 %v601, %v602
        %v604 = vsub.f32 %v596, %v603
        %v605 = vmul.f32 %v604, 1.442695
        %v606 = vpow.pop %v605
        %v607 = vsel %vm461, %v606, 0.0
        %v608 = vrot.slane %v607, 4
        %v609 = vadd.f32 %v607, %v608
        %v610 = vrot.slane %v609, 2
        %v611 = vadd.f32 %v609, %v610
        %v612 = vrot.slane %v611, 1
        %v613 = vadd.f32 %v611, %v612
        %v614 = vrcp.pop %v613
        %v615 = vmul.f32 %v606, %v614
        %616 = vrot.lane.b32.xlu0 %v340, 48
        %v617 = vpop.permute.xlu0 %616
        %v620 = vsel %vm461, %v615, 0
        %622 = vmatprep.subr.mxu0 0.0
        %623 = vmatpush1.msra.mxu0 %v617
        %624 = vmatprep.subr.mxu0 0.0
        %625 = vmatpush1.msra.mxu0 0.0
        %626 = vmatprep.subr.mxu0 0.0
        %627 = vmatpush1.msra.mxu0 0.0
        %628 = vmatprep.subr.mxu0 0.0
        %629 = vmatpush1.msra.mxu0 0.0
        %630 = vmatprep.subr.mxu0 0.0
        %631 = vmatpush1.msra.mxu0 0.0
        %632 = vmatprep.subr.mxu0 0.0
        %633 = vmatpush1.msra.mxu0 0.0
        %634 = vmatprep.subr.mxu0 0.0
        %635 = vmatpush1.msra.mxu0 0.0
        %636 = vmatprep.subr.mxu0 0.0
        %637 = vmatpush1.msra.mxu0 0.0
        %638 = vmatprep.subr.mxu0 0.0
        %639 = vmatpush1.msra.mxu0 0.0
        %640 = vmatprep.subr.mxu0 0.0
        %641 = vmatpush1.msra.mxu0 0.0
        %642 = vmatprep.subr.mxu0 0.0
        %643 = vmatpush1.msra.mxu0 0.0
        %644 = vmatprep.subr.mxu0 0.0
        %645 = vmatpush1.msra.mxu0 0.0
        %646 = vmatprep.subr.mxu0 0.0
        %647 = vmatpush1.msra.mxu0 0.0
        %648 = vmatprep.subr.mxu0 0.0
        %649 = vmatpush1.msra.mxu0 0.0
        %650 = vmatprep.subr.mxu0 0.0
        %651 = vmatpush1.msra.mxu0 0.0
        %652 = vmatprep.subr.mxu0 0.0
        %653 = vmatpush1.msra.mxu0 0.0
        %654 = vmatprep.subr.mxu0 0.0
        %655 = vmatpush1.msra.mxu0 0.0
        %656 = vmatprep.subr.mxu0 0.0
        %657 = vmatpush1.msra.mxu0 0.0
        %658 = vmatprep.subr.mxu0 0.0
        %659 = vmatpush1.msra.mxu0 0.0
        %660 = vmatprep.subr.mxu0 0.0
        %661 = vmatpush1.msra.mxu0 0.0
        %662 = vmatprep.subr.mxu0 0.0
        %663 = vmatpush1.msra.mxu0 0.0
        %664 = vmatprep.subr.mxu0 0.0
        %665 = vmatpush1.msra.mxu0 0.0
        %666 = vmatprep.subr.mxu0 0.0
        %667 = vmatpush1.msra.mxu0 0.0
        %668 = vmatprep.subr.mxu0 0.0
        %669 = vmatpush1.msra.mxu0 0.0
        %670 = vmatprep.subr.mxu0 0.0
        %671 = vmatpush1.msra.mxu0 0.0
        %672 = vmatprep.subr.mxu0 0.0
        %673 = vmatpush1.msra.mxu0 0.0
        %674 = vmatprep.subr.mxu0 0.0
        %675 = vmatpush1.msra.mxu0 0.0
        %676 = vmatprep.subr.mxu0 0.0
        %677 = vmatpush1.msra.mxu0 0.0
        %678 = vmatprep.subr.mxu0 0.0
        %679 = vmatpush1.msra.mxu0 0.0
        %680 = vmatprep.subr.mxu0 0.0
        %681 = vmatpush1.msra.mxu0 0.0
        %682 = vmatprep.subr.mxu0 0.0
        %683 = vmatpush1.msra.mxu0 0.0
        %684 = vmatprep.subr.mxu0 0.0
        %685 = vmatpush1.msra.mxu0 0.0
        %686 = vmatprep.mubr.f32.mxu0 0.0
        %687 = vmatmul.mubr.f32.gmra.mrb[0].mxu0 %v620
        %v688 = vpop.f32.mrb[0].mxu0
        %v689 = vadd.f32 0.0, %v688
        %v690 = vpop.f32.mrb[0].mxu0
        %691 = vdwg.mxu0
        %693 = vrot.lane.b32.xlu0 %v689, 16
        %v694 = vpop.permute.xlu0 %693
        %vm696 = vcmask 130048
        %v697 = vsel %vm696, %v554, %v694
        %v698 = vmax.f32 %v697, 0.0
        %699 = vst.msk [vmem:[%s243] sm:$0xff] %vm269, %v698
        %s700 = sand.u32 %s147, 1
        %s701 = scalar_lea.sflag [#allocation3], %s700
        %s702 = sand.u32 %s147, 1
        %s703 = smul.addr %s702, 8
        %s704 = scalar_lea.vmem [#allocation2], %s703
        // Predicated region
        $region41: #{tpu_custom_call.1} parent=39 // pred_check
          %p705 = pneg %p157
        $region42: #{tpu_custom_call.1} parent=39 // pred_check_branch
          %707 = sbr.rel (%p705) target = $region44
        $region43: #{tpu_custom_call.1} parent=39 // pred_region
          %s709 = ssub.s32 128, 128
          %710 = vsyncadd %s701, %s709
          %s711 = smul.addr %s19, 128
          %s712 = scalar_lea.hbm %s5, %s711
          %s714 = sshll.u32 %s704, 4
          %s715 = int_to_ptr.vmem [resolvable:$true] %s714
          %717 = dma.vmem_to_hbm [thread:$0]  %s715, 128, %s712, %s701
        $region44: #{tpu_custom_call.1} parent=39 // pred_fallthru
          _
      $region40: #{tpu_custom_call.1} parent=5 // pred_fallthru
        _
      %p718 = scmp.le.s32.totalorder 2, %s14
      // Predicated region
      $region45: #{tpu_custom_call.1} parent=5 // pred_check
        %p719 = pneg %p718
      $region46: #{tpu_custom_call.1} parent=5 // pred_check_branch
        %721 = sbr.rel (%p719) target = $region48
      $region47: #{tpu_custom_call.1} parent=5 // pred_region
        %s722 = ssub.s32 %s14, 2
        // Predicated region
        $region49: #{tpu_custom_call.1} parent=47 // pred_check
          %p723 = pneg %p163
        $region50: #{tpu_custom_call.1} parent=47 // pred_check_branch
          %725 = sbr.rel (%p723) target = $region52
        $region51: #{tpu_custom_call.1} parent=47 // pred_region
          %s726 = sand.u32 %s148, 1
          %s727 = scalar_lea.sflag [#allocation3], %s726
          %s728 = sand.u32 %s148, 1
          %s729 = smul.addr %s728, 8
          %s730 = scalar_lea.vmem [#allocation2], %s729
          %731 = dma.done %s727, 128
        $region52: #{tpu_custom_call.1} parent=47 // pred_fallthru
          _
      $region48: #{tpu_custom_call.1} parent=5 // pred_fallthru
        _
    $region6: #{tpu_custom_call.1} parent=1 // loop_footer
      %s18 = sadd.s32 1, %s14
    $region7: #{tpu_custom_call.1} parent=1 // loop_footer_branch
      %13 = sbr.rel target = $region3
    $region8: #{tpu_custom_call.1} parent=1 // loop_exit
      _
    %732 = vsyncpa [#allocation3], 1
    %s733 = scalar_lea.sflag [#allocation3], 1
    %734 = vsyncpa %s733, 1

</llo_original>
